<compile_context>
chip_gen: v7x
topology: tpu7x:2x2x1
jax: 0.10.0
libtpu: 0.0.40
codegen_flags: <defaults>
</compile_context>

<pallas_src>
import jax
import jax.numpy as jnp
from jax.experimental import pallas as pl
from jax.experimental.pallas import tpu as pltpu

LANE = 128


def _round_up(v, m):
    return ((v + m - 1) // m) * m


def _pad2(x, rows, cols):
    r, c = x.shape
    return jnp.pad(x, ((0, rows - r), (0, cols - c)))


def _layer1_kernel(z_ref, x_ref, w1t_ref, b1_ref, h_ref):
    # (TM, N) @ (N, in)  -- bf16 operands, f32 accumulation on the MXU.
    zx = jnp.dot(z_ref[...], x_ref[...], preferred_element_type=jnp.float32)
    # Weights arrive pre-transposed ([in, hid]) -> no in-kernel .T / XLU relayout.
    h = jnp.dot(zx.astype(jnp.bfloat16), w1t_ref[...],
                preferred_element_type=jnp.float32)
    h = h + b1_ref[...]                       # bias broadcast [1, hid] in f32
    h_ref[...] = jnp.maximum(h, 0.0).astype(h_ref.dtype)


def _layer2_kernel(z_ref, h_ref, w2t_ref, b2_ref, o_ref):
    # (TM, N) @ (N, hid)  -- bf16 operands, f32 accumulation.
    zh = jnp.dot(z_ref[...], h_ref[...], preferred_element_type=jnp.float32)
    out = jnp.dot(zh.astype(jnp.bfloat16), w2t_ref[...],
                  preferred_element_type=jnp.float32)
    o_ref[...] = (out + b2_ref[...]).astype(o_ref.dtype)


def gcn_forward(Z, features, w1, b1, w2, b2):
    """GCNnet forward: two row-tiled Pallas kernels over padded, bf16 operands."""
    N = Z.shape[0]
    in_f = features.shape[1]
    hid = w1.shape[0]
    out_f = w2.shape[0]

    # Pad node count and all feature dims to lane multiples (128).
    n_pad = _round_up(max(N, 8), LANE)
    in_pad = _round_up(in_f, LANE)
    hid_pad = _round_up(hid, LANE)
    out_pad = _round_up(out_f, LANE)

    # Row tile: 256 when it divides N_pad, else 128. Sized so
    # TM * n_pad * 2B * 2(double buffer) stays well inside v7x's 64 MiB VMEM.
    tm = 256 if n_pad % 256 == 0 else 128

    # Zero-pad and cast MXU operands to bf16; biases stay f32 for the add.
    z_p = _pad2(Z, n_pad, n_pad).astype(jnp.bfloat16)
    x_p = _pad2(features, n_pad, in_pad).astype(jnp.bfloat16)
    w1t = _pad2(w1.T, in_pad, hid_pad).astype(jnp.bfloat16)    # [in_pad, hid_pad]
    w2t = _pad2(w2.T, hid_pad, out_pad).astype(jnp.bfloat16)   # [hid_pad, out_pad]
    b1_p = _pad2(b1.reshape(1, -1), 1, hid_pad).astype(jnp.float32)
    b2_p = _pad2(b2.reshape(1, -1), 1, out_pad).astype(jnp.float32)

    grid = (n_pad // tm,)
    cparams = pltpu.CompilerParams(dimension_semantics=("parallel",))

    # Layer 1: h = relu((Z @ X) @ W1.T + b1), stored as bf16 (MXU operand of layer 2).
    h = pl.pallas_call(
        _layer1_kernel,
        out_shape=jax.ShapeDtypeStruct((n_pad, hid_pad), jnp.bfloat16),
        grid=grid,
        in_specs=[
            pl.BlockSpec((tm, n_pad), lambda i: (i, 0)),       # Z row tile (streamed)
            pl.BlockSpec((n_pad, in_pad), lambda i: (0, 0)),   # features (resident)
            pl.BlockSpec((in_pad, hid_pad), lambda i: (0, 0)), # W1^T (resident)
            pl.BlockSpec((1, hid_pad), lambda i: (0, 0)),      # b1 (resident)
        ],
        out_specs=pl.BlockSpec((tm, hid_pad), lambda i: (i, 0)),
        compiler_params=cparams,
    )(z_p, x_p, w1t, b1_p)

    # Layer 2: out = (Z @ h) @ W2.T + b2 (no activation, matching the reference).
    out_pad_arr = pl.pallas_call(
        _layer2_kernel,
        out_shape=jax.ShapeDtypeStruct((n_pad, out_pad), jnp.float32),
        grid=grid,
        in_specs=[
            pl.BlockSpec((tm, n_pad), lambda i: (i, 0)),        # Z row tile (streamed)
            pl.BlockSpec((n_pad, hid_pad), lambda i: (0, 0)),   # h (resident)
            pl.BlockSpec((hid_pad, out_pad), lambda i: (0, 0)), # W2^T (resident)
            pl.BlockSpec((1, out_pad), lambda i: (0, 0)),       # b2 (resident)
        ],
        out_specs=pl.BlockSpec((tm, out_pad), lambda i: (i, 0)),
        compiler_params=cparams,
    )(z_p, h, w2t, b2_p)

    # Slice away the row / lane padding.
    return out_pad_arr[:N, :out_f]


def gcn_reference(Z, features, w1, b1, w2, b2):
    """Plain-JAX f32 reference matching the PyTorch module exactly."""
    h = jnp.maximum((Z @ features) @ w1.T + b1, 0.0)
    return (Z @ h) @ w2.T + b2


if __name__ == "__main__":
    # Small shapes consistent with GCNnet(in_feats, hidden_feats, out_feats).
    N = 8            # number of graph nodes
    in_feats = 16
    hidden_feats = 32
    out_feats = 8

    key = jax.random.PRNGKey(0)
    kz, kx, kw1, kb1, kw2, kb2 = jax.random.split(key, 6)

    # Deterministic synthetic inputs / parameters.
    Z = jax.random.uniform(kz, (N, N), dtype=jnp.float32)          # dense adjacency-like
    features = jax.random.normal(kx, (N, in_feats), dtype=jnp.float32)

    # nn.Linear-style init (uniform in +-1/sqrt(fan_in)), PyTorch weight layout [out, in].
    lim1 = 1.0 / jnp.sqrt(jnp.float32(in_feats))
    w1 = jax.random.uniform(kw1, (hidden_feats, in_feats), jnp.float32, -lim1, lim1)
    b1 = jax.random.uniform(kb1, (hidden_feats,), jnp.float32, -lim1, lim1)

    lim2 = 1.0 / jnp.sqrt(jnp.float32(hidden_feats))
    w2 = jax.random.uniform(kw2, (out_feats, hidden_feats), jnp.float32, -lim2, lim2)
    b2 = jax.random.uniform(kb2, (out_feats,), jnp.float32, -lim2, lim2)

    out = gcn_forward(Z, features, w1, b1, w2, b2)
    out = jax.block_until_ready(out)

    ref = gcn_reference(Z, features, w1, b1, w2, b2)
    assert out.shape == (N, out_feats)
    # bf16 MXU operands (with f32 accumulation) -> slightly looser tolerance than pure f32.
    assert jnp.allclose(out, ref, atol=2e-2, rtol=2e-2), "Pallas kernel mismatch vs reference"

    print("KERNEL_OK")
</pallas_src>

<mosaic_0001>
module attributes {stable_mosaic.version = 11 : i64} {
  func.func @_layer1_kernel(%arg0: i32, %arg1: memref<128x128xbf16, #tpu.memory_space<vmem>>, %arg2: memref<128x128xbf16, #tpu.memory_space<vmem>>, %arg3: memref<128x128xbf16, #tpu.memory_space<vmem>>, %arg4: memref<1x128xf32, #tpu.memory_space<vmem>>, %arg5: memref<128x128xbf16, #tpu.memory_space<vmem>>) attributes {dimension_semantics = [#tpu.dimension_semantics<parallel>], iteration_bounds = array<i64: 1>, scalar_prefetch = 0 : i64, scratch_operands = 0 : i64, tpu.core_type = #tpu.core_type<tc>, window_params = [{transform_indices = @transform_0, window_bounds = array<i64: 128, 128>}, {pipeline_mode = #tpu.pipeline_mode<synchronous>, transform_indices = @transform_1, window_bounds = array<i64: 128, 128>}, {pipeline_mode = #tpu.pipeline_mode<synchronous>, transform_indices = @transform_2, window_bounds = array<i64: 128, 128>}, {pipeline_mode = #tpu.pipeline_mode<synchronous>, transform_indices = @transform_3, window_bounds = array<i64: 1, 128>}, {transform_indices = @transform_4, window_bounds = array<i64: 128, 128>}]} {
    %c0 = arith.constant 0 : index
    %c0_0 = arith.constant 0 : index
    %0 = vector.load %arg1[%c0, %c0_0] : memref<128x128xbf16, #tpu.memory_space<vmem>>, vector<128x128xbf16>
    %c0_1 = arith.constant 0 : index
    %c0_2 = arith.constant 0 : index
    %1 = vector.load %arg2[%c0_1, %c0_2] : memref<128x128xbf16, #tpu.memory_space<vmem>>, vector<128x128xbf16>
    %cst = arith.constant dense<0.000000e+00> : vector<128x128xf32>
    %2 = tpu.matmul %0, %1, %cst {dimension_numbers = #tpu.dot_dimension_numbers<[1], [0], [0], [1], [0, 0, 1, 1], [], []>} : vector<128x128xbf16>, vector<128x128xbf16>, vector<128x128xf32> -> vector<128x128xf32>
    %3 = arith.truncf %2 : vector<128x128xf32> to vector<128x128xbf16>
    %c0_3 = arith.constant 0 : index
    %c0_4 = arith.constant 0 : index
    %4 = vector.load %arg3[%c0_3, %c0_4] : memref<128x128xbf16, #tpu.memory_space<vmem>>, vector<128x128xbf16>
    %cst_5 = arith.constant dense<0.000000e+00> : vector<128x128xf32>
    %5 = tpu.matmul %3, %4, %cst_5 {dimension_numbers = #tpu.dot_dimension_numbers<[1], [0], [0], [1], [0, 0, 1, 1], [], []>} : vector<128x128xbf16>, vector<128x128xbf16>, vector<128x128xf32> -> vector<128x128xf32>
    %c0_6 = arith.constant 0 : index
    %c0_7 = arith.constant 0 : index
    %6 = vector.load %arg4[%c0_6, %c0_7] : memref<1x128xf32, #tpu.memory_space<vmem>>, vector<1x128xf32>
    %7 = vector.broadcast %6 : vector<1x128xf32> to vector<128x128xf32>
    %8 = arith.addf %5, %7 : vector<128x128xf32>
    %cst_8 = arith.constant 0.000000e+00 : f32
    %9 = vector.broadcast %cst_8 : f32 to vector<128x128xf32>
    %10 = arith.maximumf %8, %9 : vector<128x128xf32>
    %11 = arith.truncf %10 : vector<128x128xf32> to vector<128x128xbf16>
    %c0_9 = arith.constant 0 : index
    %c0_10 = arith.constant 0 : index
    %12 = vector.load %arg5[%c0_9, %c0_10] : memref<128x128xbf16, #tpu.memory_space<vmem>>, vector<128x128xbf16>
    tpu.vector_store %arg5[%c0_9, %c0_10], %11 {strides = array<i32>} : memref<128x128xbf16, #tpu.memory_space<vmem>>, vector<128x128xbf16>,
    return
  }
  func.func @transform_0(%arg0: i32) -> (i32, i32) {
    %c0_i32 = arith.constant 0 : i32
    %c0_i32_0 = arith.constant 0 : i32
    return %arg0, %c0_i32 : i32, i32
  }
  func.func @transform_1(%arg0: i32) -> (i32, i32) {
    %c0_i32 = arith.constant 0 : i32
    %c0_i32_0 = arith.constant 0 : i32
    %c0_i32_1 = arith.constant 0 : i32
    return %c0_i32, %c0_i32_0 : i32, i32
  }
  func.func @transform_2(%arg0: i32) -> (i32, i32) {
    %c0_i32 = arith.constant 0 : i32
    %c0_i32_0 = arith.constant 0 : i32
    %c0_i32_1 = arith.constant 0 : i32
    return %c0_i32, %c0_i32_0 : i32, i32
  }
  func.func @transform_3(%arg0: i32) -> (i32, i32) {
    %c0_i32 = arith.constant 0 : i32
    %c0_i32_0 = arith.constant 0 : i32
    %c0_i32_1 = arith.constant 0 : i32
    return %c0_i32, %c0_i32_0 : i32, i32
  }
  func.func @transform_4(%arg0: i32) -> (i32, i32) {
    %c0_i32 = arith.constant 0 : i32
    %c0_i32_0 = arith.constant 0 : i32
    return %arg0, %c0_i32 : i32, i32
  }
}

</mosaic_0001>

<llo_original>
// kernel: tpu_custom_call.1
$region0: #{tpu_custom_call.1}
  #allocation0 [shape = 'u32[]', space=smem, size = 0x4, offset = 0x4, fixed_abs, tag = 'smem constant byte address 0x4 - core index']
  #allocation1 [shape = 'u32[144,128]{1,0:T(1,128)}', space=vmem, size = 0x12000, scoped, tag = 'internal scratch']
  %s0 = inlined_call_operand.hbm [shape: bf16[128,128], index: 0, kind: input, shape index: {}]
  %s1 = inlined_call_operand.hbm [shape: bf16[128,128], index: 1, kind: input, shape index: {}]
  %s2 = inlined_call_operand.hbm [shape: bf16[128,128], index: 2, kind: input, shape index: {}]
  %s3 = inlined_call_operand.vmem [shape: f32[1,128], index: 3, kind: input, shape index: {}]
  %s4 = inlined_call_operand.hbm [shape: bf16[128,128], index: 4, kind: output, shape index: {}]
  %s5 = sld [smem:[#allocation0]]
  $region38: #{tpu_custom_call.1} parent=0
    _
  %s7 = ssub.s32 1, %s5
  %s8 = scalar_select 0, %s7, %s5
  $region1: #{tpu_custom_call.1} parent=0
    #allocation2 [shape = 'u8[32768]{0}', space=vmem, size = 0x8000, scoped, tag = 'input window, operand 0, single buffered']
    #allocation3 [shape = 's32[1]{0}', space=sflag, size = 0x4, scoped, tag = 'scoped memory for tpu_custom_call.1']
    #allocation4 [shape = 's32[1]{0}', space=sflag, size = 0x4, scoped, tag = 'scoped memory for tpu_custom_call.1']
    #allocation5 [shape = 'u8[32768]{0}', space=vmem, size = 0x8000, scoped, tag = 'input window, operand 1, single buffered']
    #allocation6 [shape = 's32[1]{0}', space=sflag, size = 0x4, scoped, tag = 'scoped memory for tpu_custom_call.1']
    #allocation7 [shape = 'u8[32768]{0}', space=vmem, size = 0x8000, scoped, tag = 'input window, operand 2, single buffered']
    #allocation8 [shape = 'u8[32768]{0}', space=vmem, size = 0x8000, scoped, tag = 'output window, operand 0, single buffered']
    %9 = vsyncpa [#allocation3], 0
    %10 = vsyncpa [#allocation6], 0
    %11 = vsyncpa [#allocation4], 0
    // Predicated region
    $region2: #{tpu_custom_call.1} parent=1 // pred_check
      _
    $region3: #{tpu_custom_call.1} parent=1 // pred_check_branch
      %13 = sbr.rel (0) target = $region5
    $region4: #{tpu_custom_call.1} parent=1 // pred_region
      %s15 = ssub.s32 1024, 1024
      %16 = vsyncadd [#allocation3], %s15
      %s17 = sshll.u32 [#allocation2], 4
      %s18 = int_to_ptr.vmem [resolvable:$true] %s17
      %23 = dma.hbm_to_vmem [thread:$0]  %s0, 1024, %s18, [#allocation3], 64, 64, 4
    $region5: #{tpu_custom_call.1} parent=1 // pred_fallthru
      _
    // Predicated region
    $region6: #{tpu_custom_call.1} parent=1 // pred_check
      _
    $region7: #{tpu_custom_call.1} parent=1 // pred_check_branch
      %25 = sbr.rel (0) target = $region9
    $region8: #{tpu_custom_call.1} parent=1 // pred_region
      %s27 = ssub.s32 1024, 1024
      %28 = vsyncadd [#allocation6], %s27
      %s29 = sshll.u32 [#allocation5], 4
      %s30 = int_to_ptr.vmem [resolvable:$true] %s29
      %35 = dma.hbm_to_vmem [thread:$0]  %s1, 1024, %s30, [#allocation6], 64, 64, 4
    $region9: #{tpu_custom_call.1} parent=1 // pred_fallthru
      _
    // Predicated region
    $region10: #{tpu_custom_call.1} parent=1 // pred_check
      _
    $region11: #{tpu_custom_call.1} parent=1 // pred_check_branch
      %37 = sbr.rel (0) target = $region13
    $region12: #{tpu_custom_call.1} parent=1 // pred_region
      %s39 = ssub.s32 1024, 1024
      %40 = vsyncadd [#allocation6], %s39
      %s41 = sshll.u32 [#allocation7], 4
      %s42 = int_to_ptr.vmem [resolvable:$true] %s41
      %47 = dma.hbm_to_vmem [thread:$0]  %s2, 1024, %s42, [#allocation6], 64, 64, 4
    $region13: #{tpu_custom_call.1} parent=1 // pred_fallthru
      _
    // Predicated region
    $region14: #{tpu_custom_call.1} parent=1 // pred_check
      _
    $region15: #{tpu_custom_call.1} parent=1 // pred_check_branch
      %49 = sbr.rel (0) target = $region17
    $region16: #{tpu_custom_call.1} parent=1 // pred_region
      _
    $region17: #{tpu_custom_call.1} parent=1 // pred_fallthru
      _
    // Predicated region
    $region18: #{tpu_custom_call.1} parent=1 // pred_check
      _
    $region19: #{tpu_custom_call.1} parent=1 // pred_check_branch
      %51 = sbr.rel (0) target = $region21
    $region20: #{tpu_custom_call.1} parent=1 // pred_region
      %52 = dma.done [#allocation3], 1024
    $region21: #{tpu_custom_call.1} parent=1 // pred_fallthru
      _
    // Predicated region
    $region22: #{tpu_custom_call.1} parent=1 // pred_check
      _
    $region23: #{tpu_custom_call.1} parent=1 // pred_check_branch
      %54 = sbr.rel (0) target = $region25
    $region24: #{tpu_custom_call.1} parent=1 // pred_region
      %55 = dma.done [#allocation6], 1024
    $region25: #{tpu_custom_call.1} parent=1 // pred_fallthru
      _
    // Predicated region
    $region26: #{tpu_custom_call.1} parent=1 // pred_check
      _
    $region27: #{tpu_custom_call.1} parent=1 // pred_check_branch
      %57 = sbr.rel (0) target = $region29
    $region28: #{tpu_custom_call.1} parent=1 // pred_region
      %58 = dma.done [#allocation6], 1024
    $region29: #{tpu_custom_call.1} parent=1 // pred_fallthru
      _
    %v60 = vld [vmem:[#allocation2] sm:$0xf]
    %v61 = vld [vmem:[#allocation2 + $0x4] sm:$0xf]
    %v62 = vld [vmem:[#allocation2 + $0x8] sm:$0xf]
    %v63 = vld [vmem:[#allocation2 + $0xc] sm:$0xf]
    %v64 = vld [vmem:[#allocation2 + $0x10] sm:$0xf]
    %v65 = vld [vmem:[#allocation2 + $0x14] sm:$0xf]
    %v66 = vld [vmem:[#allocation2 + $0x18] sm:$0xf]
    %v67 = vld [vmem:[#allocation2 + $0x1c] sm:$0xf]
    %v68 = vld [vmem:[#allocation2 + $0x20] sm:$0xf]
    %v69 = vld [vmem:[#allocation2 + $0x24] sm:$0xf]
    %v70 = vld [vmem:[#allocation2 + $0x28] sm:$0xf]
    %v71 = vld [vmem:[#allocation2 + $0x2c] sm:$0xf]
    %v72 = vld [vmem:[#allocation2 + $0x30] sm:$0xf]
    %v73 = vld [vmem:[#allocation2 + $0x34] sm:$0xf]
    %v74 = vld [vmem:[#allocation2 + $0x38] sm:$0xf]
    %v75 = vld [vmem:[#allocation2 + $0x3c] sm:$0xf]
    %v76 = vld [vmem:[#allocation5] sm:$0xf]
    %v77 = vld [vmem:[#allocation5 + $0x4] sm:$0xf]
    %v78 = vld [vmem:[#allocation5 + $0x8] sm:$0xf]
    %v79 = vld [vmem:[#allocation5 + $0xc] sm:$0xf]
    %v80 = vld [vmem:[#allocation5 + $0x10] sm:$0xf]
    %v81 = vld [vmem:[#allocation5 + $0x14] sm:$0xf]
    %v82 = vld [vmem:[#allocation5 + $0x18] sm:$0xf]
    %v83 = vld [vmem:[#allocation5 + $0x1c] sm:$0xf]
    %v84 = vld [vmem:[#allocation5 + $0x20] sm:$0xf]
    %v85 = vld [vmem:[#allocation5 + $0x24] sm:$0xf]
    %v86 = vld [vmem:[#allocation5 + $0x28] sm:$0xf]
    %v87 = vld [vmem:[#allocation5 + $0x2c] sm:$0xf]
    %v88 = vld [vmem:[#allocation5 + $0x30] sm:$0xf]
    %v89 = vld [vmem:[#allocation5 + $0x34] sm:$0xf]
    %v90 = vld [vmem:[#allocation5 + $0x38] sm:$0xf]
    %v91 = vld [vmem:[#allocation5 + $0x3c] sm:$0xf]
    %v108 = vunpack.c.l.b16 %v60
    %v109 = vunpack.c.l.b16 %v61
    %v110 = vunpack.c.l.b16 %v62
    %v111 = vunpack.c.l.b16 %v63
    %v112 = vunpack.c.l.b16 %v64
    %v113 = vunpack.c.l.b16 %v65
    %v114 = vunpack.c.l.b16 %v66
    %v115 = vunpack.c.l.b16 %v67
    %v116 = vunpack.c.l.b16 %v68
    %v117 = vunpack.c.l.b16 %v69
    %v118 = vunpack.c.l.b16 %v70
    %v119 = vunpack.c.l.b16 %v71
    %v120 = vunpack.c.l.b16 %v72
    %v121 = vunpack.c.l.b16 %v73
    %v122 = vunpack.c.l.b16 %v74
    %v123 = vunpack.c.l.b16 %v75
    %v124 = vpack.c.b16 %v109, %v108
    %v125 = vpack.c.b16 %v111, %v110
    %v126 = vpack.c.b16 %v113, %v112
    %v127 = vpack.c.b16 %v115, %v114
    %v128 = vpack.c.b16 %v117, %v116
    %v129 = vpack.c.b16 %v119, %v118
    %v130 = vpack.c.b16 %v121, %v120
    %v131 = vpack.c.b16 %v123, %v122
    %v156 = vunpack.c.l.b16 %v76
    %v157 = vunpack.c.l.b16 %v77
    %v158 = vunpack.c.l.b16 %v78
    %v159 = vunpack.c.l.b16 %v79
    %v160 = vunpack.c.l.b16 %v80
    %v161 = vunpack.c.l.b16 %v81
    %v162 = vunpack.c.l.b16 %v82
    %v163 = vunpack.c.l.b16 %v83
    %v164 = vunpack.c.l.b16 %v84
    %v165 = vunpack.c.l.b16 %v85
    %v166 = vunpack.c.l.b16 %v86
    %v167 = vunpack.c.l.b16 %v87
    %v168 = vunpack.c.l.b16 %v88
    %v169 = vunpack.c.l.b16 %v89
    %v170 = vunpack.c.l.b16 %v90
    %v171 = vunpack.c.l.b16 %v91
    %v172 = vpack.c.b16 %v157, %v156
    %v173 = vpack.c.b16 %v159, %v158
    %v174 = vpack.c.b16 %v161, %v160
    %v175 = vpack.c.b16 %v163, %v162
    %v176 = vpack.c.b16 %v165, %v164
    %v177 = vpack.c.b16 %v167, %v166
    %v178 = vpack.c.b16 %v169, %v168
    %v179 = vpack.c.b16 %v171, %v170
    %188 = vmatprep.subr.bf16.mxu0 0
    %189 = vmatpush1.bf16.msra.mxu0 %v172
    %190 = vmatprep.subr.bf16.mxu0 0
    %191 = vmatpush1.bf16.msra.mxu0 %v173
    %192 = vmatprep.subr.bf16.mxu0 0
    %193 = vmatpush1.bf16.msra.mxu0 %v174
    %194 = vmatprep.subr.bf16.mxu0 0
    %195 = vmatpush1.bf16.msra.mxu0 %v175
    %196 = vmatprep.subr.bf16.mxu0 0
    %197 = vmatpush1.bf16.msra.mxu0 %v176
    %198 = vmatprep.subr.bf16.mxu0 0
    %199 = vmatpush1.bf16.msra.mxu0 %v177
    %200 = vmatprep.subr.bf16.mxu0 0
    %201 = vmatpush1.bf16.msra.mxu0 %v178
    %202 = vmatprep.subr.bf16.mxu0 0
    %203 = vmatpush1.bf16.msra.mxu0 %v179
    %204 = vmatprep.subr.bf16.mxu0 0
    %205 = vmatpush1.bf16.msra.mxu0 0
    %206 = vmatprep.subr.bf16.mxu0 0
    %207 = vmatpush1.bf16.msra.mxu0 0
    %208 = vmatprep.subr.bf16.mxu0 0
    %209 = vmatpush1.bf16.msra.mxu0 0
    %210 = vmatprep.subr.bf16.mxu0 0
    %211 = vmatpush1.bf16.msra.mxu0 0
    %212 = vmatprep.subr.bf16.mxu0 0
    %213 = vmatpush1.bf16.msra.mxu0 0
    %214 = vmatprep.subr.bf16.mxu0 0
    %215 = vmatpush1.bf16.msra.mxu0 0
    %216 = vmatprep.subr.bf16.mxu0 0
    %217 = vmatpush1.bf16.msra.mxu0 0
    %218 = vmatprep.subr.bf16.mxu0 0
    %219 = vmatpush1.bf16.msra.mxu0 0
    %220 = vmatprep.mubr.bf16.mxu0 0
    %221 = vmatmul.mubr.bf16.gmra.mrb[0].mxu0 %v124
    %v222 = vpop.f32.mrb[0].mxu0
    %v223 = vadd.f32 0.0, %v222
    %v224 = vpop.f32.mrb[0].mxu0
    %v225 = vpop.f32.mrb[0].mxu0
    %v226 = vadd.f32 0.0, %v225
    %v227 = vpop.f32.mrb[0].mxu0
    %228 = vmatprep.mubr.bf16.mxu0 0
    %229 = vmatmul.mubr.bf16.gmra.mrb[0].mxu0 %v125
    %v230 = vpop.f32.mrb[0].mxu0
    %v231 = vadd.f32 0.0, %v230
    %v232 = vpop.f32.mrb[0].mxu0
    %v233 = vpop.f32.mrb[0].mxu0
    %v234 = vadd.f32 0.0, %v233
    %v235 = vpop.f32.mrb[0].mxu0
    %236 = vmatprep.mubr.bf16.mxu0 0
    %237 = vmatmul.mubr.bf16.gmra.mrb[0].mxu0 %v126
    %v238 = vpop.f32.mrb[0].mxu0
    %v239 = vadd.f32 0.0, %v238
    %v240 = vpop.f32.mrb[0].mxu0
    %v241 = vpop.f32.mrb[0].mxu0
    %v242 = vadd.f32 0.0, %v241
    %v243 = vpop.f32.mrb[0].mxu0
    %244 = vmatprep.mubr.bf16.mxu0 0
    %245 = vmatmul.mubr.bf16.gmra.mrb[0].mxu0 %v127
    %v246 = vpop.f32.mrb[0].mxu0
    %v247 = vadd.f32 0.0, %v246
    %v248 = vpop.f32.mrb[0].mxu0
    %v249 = vpop.f32.mrb[0].mxu0
    %v250 = vadd.f32 0.0, %v249
    %v251 = vpop.f32.mrb[0].mxu0
    %252 = vmatprep.mubr.bf16.mxu0 0
    %253 = vmatmul.mubr.bf16.gmra.mrb[0].mxu0 %v128
    %v254 = vpop.f32.mrb[0].mxu0
    %v255 = vadd.f32 0.0, %v254
    %v256 = vpop.f32.mrb[0].mxu0
    %v257 = vpop.f32.mrb[0].mxu0
    %v258 = vadd.f32 0.0, %v257
    %v259 = vpop.f32.mrb[0].mxu0
    %260 = vmatprep.mubr.bf16.mxu0 0
    %261 = vmatmul.mubr.bf16.gmra.mrb[0].mxu0 %v129
    %v262 = vpop.f32.mrb[0].mxu0
    %v263 = vadd.f32 0.0, %v262
    %v264 = vpop.f32.mrb[0].mxu0
    %v265 = vpop.f32.mrb[0].mxu0
    %v266 = vadd.f32 0.0, %v265
    %v267 = vpop.f32.mrb[0].mxu0
    %268 = vmatprep.mubr.bf16.mxu0 0
    %269 = vmatmul.mubr.bf16.gmra.mrb[0].mxu0 %v130
    %v270 = vpop.f32.mrb[0].mxu0
    %v271 = vadd.f32 0.0, %v270
    %v272 = vpop.f32.mrb[0].mxu0
    %v273 = vpop.f32.mrb[0].mxu0
    %v274 = vadd.f32 0.0, %v273
    %v275 = vpop.f32.mrb[0].mxu0
    %276 = vmatprep.mubr.bf16.mxu0 0
    %277 = vmatmul.mubr.bf16.gmra.mrb[0].mxu0 %v131
    %v278 = vpop.f32.mrb[0].mxu0
    %v279 = vadd.f32 0.0, %v278
    %v280 = vpop.f32.mrb[0].mxu0
    %v281 = vpop.f32.mrb[0].mxu0
    %v282 = vadd.f32 0.0, %v281
    %v283 = vpop.f32.mrb[0].mxu0
    %284 = vdwg.mxu0
    %v285 = vpack.c.bf16 %v226, %v223
    %v286 = vpack.c.bf16 %v234, %v231
    %v287 = vpack.c.bf16 %v242, %v239
    %v288 = vpack.c.bf16 %v250, %v247
    %v289 = vpack.c.bf16 %v258, %v255
    %v290 = vpack.c.bf16 %v266, %v263
    %v291 = vpack.c.bf16 %v274, %v271
    %v292 = vpack.c.bf16 %v282, %v279
    %v293 = vld [vmem:[#allocation7] sm:$0xf]
    %v294 = vld [vmem:[#allocation7 + $0x4] sm:$0xf]
    %v295 = vld [vmem:[#allocation7 + $0x8] sm:$0xf]
    %v296 = vld [vmem:[#allocation7 + $0xc] sm:$0xf]
    %v297 = vld [vmem:[#allocation7 + $0x10] sm:$0xf]
    %v298 = vld [vmem:[#allocation7 + $0x14] sm:$0xf]
    %v299 = vld [vmem:[#allocation7 + $0x18] sm:$0xf]
    %v300 = vld [vmem:[#allocation7 + $0x1c] sm:$0xf]
    %v301 = vld [vmem:[#allocation7 + $0x20] sm:$0xf]
    %v302 = vld [vmem:[#allocation7 + $0x24] sm:$0xf]
    %v303 = vld [vmem:[#allocation7 + $0x28] sm:$0xf]
    %v304 = vld [vmem:[#allocation7 + $0x2c] sm:$0xf]
    %v305 = vld [vmem:[#allocation7 + $0x30] sm:$0xf]
    %v306 = vld [vmem:[#allocation7 + $0x34] sm:$0xf]
    %v307 = vld [vmem:[#allocation7 + $0x38] sm:$0xf]
    %v308 = vld [vmem:[#allocation7 + $0x3c] sm:$0xf]
    %v309 = vld [vmem:[%s3] sm:$0x1]
    %v311 = vlaneseq
    %v312 = vshrl.u32 %v311, 7
    %v313 = vsub.s32 0, %v312
    %v314 = vrot.slane %v309, %v313
    %v332 = vunpack.c.l.b16 %v293
    %v333 = vunpack.c.l.b16 %v294
    %v334 = vunpack.c.l.b16 %v295
    %v335 = vunpack.c.l.b16 %v296
    %v336 = vunpack.c.l.b16 %v297
    %v337 = vunpack.c.l.b16 %v298
    %v338 = vunpack.c.l.b16 %v299
    %v339 = vunpack.c.l.b16 %v300
    %v340 = vunpack.c.l.b16 %v301
    %v341 = vunpack.c.l.b16 %v302
    %v342 = vunpack.c.l.b16 %v303
    %v343 = vunpack.c.l.b16 %v304
    %v344 = vunpack.c.l.b16 %v305
    %v345 = vunpack.c.l.b16 %v306
    %v346 = vunpack.c.l.b16 %v307
    %v347 = vunpack.c.l.b16 %v308
    %v348 = vpack.c.b16 %v333, %v332
    %v349 = vpack.c.b16 %v335, %v334
    %v350 = vpack.c.b16 %v337, %v336
    %v351 = vpack.c.b16 %v339, %v338
    %v352 = vpack.c.b16 %v341, %v340
    %v353 = vpack.c.b16 %v343, %v342
    %v354 = vpack.c.b16 %v345, %v344
    %v355 = vpack.c.b16 %v347, %v346
    %364 = vmatprep.subr.bf16.mxu0 0
    %365 = vmatpush1.bf16.msra.mxu0 %v348
    %366 = vmatprep.subr.bf16.mxu0 0
    %367 = vmatpush1.bf16.msra.mxu0 %v349
    %368 = vmatprep.subr.bf16.mxu0 0
    %369 = vmatpush1.bf16.msra.mxu0 %v350
    %370 = vmatprep.subr.bf16.mxu0 0
    %371 = vmatpush1.bf16.msra.mxu0 %v351
    %372 = vmatprep.subr.bf16.mxu0 0
    %373 = vmatpush1.bf16.msra.mxu0 %v352
    %374 = vmatprep.subr.bf16.mxu0 0
    %375 = vmatpush1.bf16.msra.mxu0 %v353
    %376 = vmatprep.subr.bf16.mxu0 0
    %377 = vmatpush1.bf16.msra.mxu0 %v354
    %378 = vmatprep.subr.bf16.mxu0 0
    %379 = vmatpush1.bf16.msra.mxu0 %v355
    %380 = vmatprep.subr.bf16.mxu0 0
    %381 = vmatpush1.bf16.msra.mxu0 0
    %382 = vmatprep.subr.bf16.mxu0 0
    %383 = vmatpush1.bf16.msra.mxu0 0
    %384 = vmatprep.subr.bf16.mxu0 0
    %385 = vmatpush1.bf16.msra.mxu0 0
    %386 = vmatprep.subr.bf16.mxu0 0
    %387 = vmatpush1.bf16.msra.mxu0 0
    %388 = vmatprep.subr.bf16.mxu0 0
    %389 = vmatpush1.bf16.msra.mxu0 0
    %390 = vmatprep.subr.bf16.mxu0 0
    %391 = vmatpush1.bf16.msra.mxu0 0
    %392 = vmatprep.subr.bf16.mxu0 0
    %393 = vmatpush1.bf16.msra.mxu0 0
    %394 = vmatprep.subr.bf16.mxu0 0
    %395 = vmatpush1.bf16.msra.mxu0 0
    %396 = vmatprep.mubr.bf16.mxu0 0
    %397 = vmatmul.mubr.bf16.gmra.mrb[0].mxu0 %v285
    %v398 = vpop.f32.mrb[0].mxu0
    %v399 = vadd.f32 %v314, %v398
    %v400 = vpop.f32.mrb[0].mxu0
    %v401 = vpop.f32.mrb[0].mxu0
    %v402 = vadd.f32 %v314, %v401
    %v403 = vpop.f32.mrb[0].mxu0
    %404 = vmatprep.mubr.bf16.mxu0 0
    %405 = vmatmul.mubr.bf16.gmra.mrb[0].mxu0 %v286
    %v406 = vpop.f32.mrb[0].mxu0
    %v407 = vadd.f32 %v314, %v406
    %v408 = vpop.f32.mrb[0].mxu0
    %v409 = vpop.f32.mrb[0].mxu0
    %v410 = vadd.f32 %v314, %v409
    %v411 = vpop.f32.mrb[0].mxu0
    %412 = vmatprep.mubr.bf16.mxu0 0
    %413 = vmatmul.mubr.bf16.gmra.mrb[0].mxu0 %v287
    %v414 = vpop.f32.mrb[0].mxu0
    %v415 = vadd.f32 %v314, %v414
    %v416 = vpop.f32.mrb[0].mxu0
    %v417 = vpop.f32.mrb[0].mxu0
    %v418 = vadd.f32 %v314, %v417
    %v419 = vpop.f32.mrb[0].mxu0
    %420 = vmatprep.mubr.bf16.mxu0 0
    %421 = vmatmul.mubr.bf16.gmra.mrb[0].mxu0 %v288
    %v422 = vpop.f32.mrb[0].mxu0
    %v423 = vadd.f32 %v314, %v422
    %v424 = vpop.f32.mrb[0].mxu0
    %v425 = vpop.f32.mrb[0].mxu0
    %v426 = vadd.f32 %v314, %v425
    %v427 = vpop.f32.mrb[0].mxu0
    %428 = vmatprep.mubr.bf16.mxu0 0
    %429 = vmatmul.mubr.bf16.gmra.mrb[0].mxu0 %v289
    %v430 = vpop.f32.mrb[0].mxu0
    %v431 = vadd.f32 %v314, %v430
    %v432 = vpop.f32.mrb[0].mxu0
    %v433 = vpop.f32.mrb[0].mxu0
    %v434 = vadd.f32 %v314, %v433
    %v435 = vpop.f32.mrb[0].mxu0
    %436 = vmatprep.mubr.bf16.mxu0 0
    %437 = vmatmul.mubr.bf16.gmra.mrb[0].mxu0 %v290
    %v438 = vpop.f32.mrb[0].mxu0
    %v439 = vadd.f32 %v314, %v438
    %v440 = vpop.f32.mrb[0].mxu0
    %v441 = vpop.f32.mrb[0].mxu0
    %v442 = vadd.f32 %v314, %v441
    %v443 = vpop.f32.mrb[0].mxu0
    %444 = vmatprep.mubr.bf16.mxu0 0
    %445 = vmatmul.mubr.bf16.gmra.mrb[0].mxu0 %v291
    %v446 = vpop.f32.mrb[0].mxu0
    %v447 = vadd.f32 %v314, %v446
    %v448 = vpop.f32.mrb[0].mxu0
    %v449 = vpop.f32.mrb[0].mxu0
    %v450 = vadd.f32 %v314, %v449
    %v451 = vpop.f32.mrb[0].mxu0
    %452 = vmatprep.mubr.bf16.mxu0 0
    %453 = vmatmul.mubr.bf16.gmra.mrb[0].mxu0 %v292
    %v454 = vpop.f32.mrb[0].mxu0
    %v455 = vadd.f32 %v314, %v454
    %v456 = vpop.f32.mrb[0].mxu0
    %v457 = vpop.f32.mrb[0].mxu0
    %v458 = vadd.f32 %v314, %v457
    %v459 = vpop.f32.mrb[0].mxu0
    %460 = vdwg.mxu0
    %v461 = vmax.f32 %v399, 0.0
    %v462 = vmax.f32 %v402, 0.0
    %v463 = vmax.f32 %v407, 0.0
    %v464 = vmax.f32 %v410, 0.0
    %v465 = vmax.f32 %v415, 0.0
    %v466 = vmax.f32 %v418, 0.0
    %v467 = vmax.f32 %v423, 0.0
    %v468 = vmax.f32 %v426, 0.0
    %v469 = vmax.f32 %v431, 0.0
    %v470 = vmax.f32 %v434, 0.0
    %v471 = vmax.f32 %v439, 0.0
    %v472 = vmax.f32 %v442, 0.0
    %v473 = vmax.f32 %v447, 0.0
    %v474 = vmax.f32 %v450, 0.0
    %v475 = vmax.f32 %v455, 0.0
    %v476 = vmax.f32 %v458, 0.0
    %v477 = vpack.c.bf16 %v462, %v461
    %v478 = vpack.c.bf16 %v464, %v463
    %v479 = vpack.c.bf16 %v466, %v465
    %v480 = vpack.c.bf16 %v468, %v467
    %v481 = vpack.c.bf16 %v470, %v469
    %v482 = vpack.c.bf16 %v472, %v471
    %v483 = vpack.c.bf16 %v474, %v473
    %v484 = vpack.c.bf16 %v476, %v475
    %v493 = vunpack.c.l.b16 %v477
    %v494 = vunpack.c.h.b16 %v477
    %v495 = vunpack.c.l.b16 %v478
    %v496 = vunpack.c.h.b16 %v478
    %v497 = vunpack.c.l.b16 %v479
    %v498 = vunpack.c.h.b16 %v479
    %v499 = vunpack.c.l.b16 %v480
    %v500 = vunpack.c.h.b16 %v480
    %v501 = vunpack.c.l.b16 %v481
    %v502 = vunpack.c.h.b16 %v481
    %v503 = vunpack.c.l.b16 %v482
    %v504 = vunpack.c.h.b16 %v482
    %v505 = vunpack.c.l.b16 %v483
    %v506 = vunpack.c.h.b16 %v483
    %v507 = vunpack.c.l.b16 %v484
    %v508 = vunpack.c.h.b16 %v484
    %v509 = vpack.c.b16 %v493, %v493
    %v510 = vpack.c.b16 %v494, %v494
    %v511 = vpack.c.b16 %v495, %v495
    %v512 = vpack.c.b16 %v496, %v496
    %v513 = vpack.c.b16 %v497, %v497
    %v514 = vpack.c.b16 %v498, %v498
    %v515 = vpack.c.b16 %v499, %v499
    %v516 = vpack.c.b16 %v500, %v500
    %v517 = vpack.c.b16 %v501, %v501
    %v518 = vpack.c.b16 %v502, %v502
    %v519 = vpack.c.b16 %v503, %v503
    %v520 = vpack.c.b16 %v504, %v504
    %v521 = vpack.c.b16 %v505, %v505
    %v522 = vpack.c.b16 %v506, %v506
    %v523 = vpack.c.b16 %v507, %v507
    %v524 = vpack.c.b16 %v508, %v508
    %541 = vst [vmem:[#allocation8] sm:$0xf] %v509
    %542 = vst [vmem:[#allocation8 + $0x4] sm:$0xf] %v510
    %543 = vst [vmem:[#allocation8 + $0x8] sm:$0xf] %v511
    %544 = vst [vmem:[#allocation8 + $0xc] sm:$0xf] %v512
    %545 = vst [vmem:[#allocation8 + $0x10] sm:$0xf] %v513
    %546 = vst [vmem:[#allocation8 + $0x14] sm:$0xf] %v514
    %547 = vst [vmem:[#allocation8 + $0x18] sm:$0xf] %v515
    %548 = vst [vmem:[#allocation8 + $0x1c] sm:$0xf] %v516
    %549 = vst [vmem:[#allocation8 + $0x20] sm:$0xf] %v517
    %550 = vst [vmem:[#allocation8 + $0x24] sm:$0xf] %v518
    %551 = vst [vmem:[#allocation8 + $0x28] sm:$0xf] %v519
    %552 = vst [vmem:[#allocation8 + $0x2c] sm:$0xf] %v520
    %553 = vst [vmem:[#allocation8 + $0x30] sm:$0xf] %v521
    %554 = vst [vmem:[#allocation8 + $0x34] sm:$0xf] %v522
    %555 = vst [vmem:[#allocation8 + $0x38] sm:$0xf] %v523
    %556 = vst [vmem:[#allocation8 + $0x3c] sm:$0xf] %v524
    // Predicated region
    $region30: #{tpu_custom_call.1} parent=1 // pred_check
      _
    $region31: #{tpu_custom_call.1} parent=1 // pred_check_branch
      %558 = sbr.rel (0) target = $region33
    $region32: #{tpu_custom_call.1} parent=1 // pred_region
      %s560 = ssub.s32 1024, 1024
      %561 = vsyncadd [#allocation4], %s560
      %s562 = sshll.u32 [#allocation8], 4
      %s563 = int_to_ptr.vmem [resolvable:$true] %s562
      %568 = dma.vmem_to_hbm [thread:$0]  %s563, 1024, %s4, [#allocation4], 64, 64, 4
    $region33: #{tpu_custom_call.1} parent=1 // pred_fallthru
      _
    // Predicated region
    $region34: #{tpu_custom_call.1} parent=1 // pred_check
      _
    $region35: #{tpu_custom_call.1} parent=1 // pred_check_branch
      %570 = sbr.rel (0) target = $region37
    $region36: #{tpu_custom_call.1} parent=1 // pred_region
      %571 = dma.done [#allocation4], 1024
    $region37: #{tpu_custom_call.1} parent=1 // pred_fallthru
      _
    %572 = vsyncpa [#allocation3], 1
    %573 = vsyncpa [#allocation6], 1
    %574 = vsyncpa [#allocation4], 1

</llo_original>
